<compile_context>
chip_gen: v7x
topology: tpu7x:2x2x1
jax: 0.10.0
libtpu: 0.0.40
codegen_flags: <defaults>
</compile_context>

<pallas_src>
import jax
import jax.numpy as jnp
from jax import lax
from jax.experimental import pallas as pl
from jax.experimental.pallas import tpu as pltpu


# ----------------------------- Pallas kernel --------------------------------
def _lstm_tagger_kernel(gx_ref,      # (T*Bp, 4H) f32  gate pre-activations (emb@Wih + b), g-cols pre-scaled x2
                        mask_ref,    # (T*Bp, H)  f32  1.0 for valid (t, b), else 0.0 (full lane width)
                        invlen_ref,  # (Bp, 1)    f32  1/length (dummy rows = 1.0)
                        whh_ref,     # (H, 4H)    f32  (= weight_hh_l0.T, g-cols pre-scaled x2)
                        wfc_ref,     # (H, O)     f32  (= hidden2tag.weight.T)
                        bfc_ref,     # (1, O)     f32
                        out_ref):    # (Bp, O)    f32  log-softmax scores
    Bp = invlen_ref.shape[0]
    TB = gx_ref.shape[0]
    T = TB // Bp
    H = whh_ref.shape[0]

    whh = whh_ref[...]
    gx = gx_ref[...]       # 8 vregs at T*Bp=64, 4H=128; slices stay in registers
    mask = mask_ref[...]

    h = jnp.zeros((Bp, H), jnp.float32)
    c = jnp.zeros((Bp, H), jnp.float32)
    s = jnp.zeros((Bp, H), jnp.float32)

    # T is static and tiny -> trace-time unroll with concrete, 8-sublane-aligned slices.
    # TODO(synk): a dynamic max-length loop bound would need lax.fori_loop without unroll.
    for t in range(T):
        gates = gx[t * Bp:(t + 1) * Bp, :] + jnp.dot(
            h, whh, preferred_element_type=jnp.float32)        # (Bp, 4H)
        # Single full-width EUP pass over the lane-dense 4H=128 gates vreg.
        # PyTorch LSTM gate order: input, forget, cell(g), output.  The g-gate
        # pre-activations were pre-scaled by 2, so tanh(g) == 2*sigmoid(2g) - 1
        # comes out of the same sigmoid result (VPU only, no extra EUP pass).
        sig = jax.nn.sigmoid(gates)
        i_g = sig[:, 0 * H:1 * H]
        f_g = sig[:, 1 * H:2 * H]
        g_g = 2.0 * sig[:, 2 * H:3 * H] - 1.0
        o_g = sig[:, 3 * H:4 * H]
        c = f_g * c + i_g * g_g
        h = o_g * jnp.tanh(c)
        # pack/pad_packed semantics: padded timesteps contribute zeros to the sum.
        s = s + h * mask[t * Bp:(t + 1) * Bp, :]

    # "averaged /= lengths" — 1/length precomputed exactly in the wrapper.
    averaged = s * invlen_ref[...]                              # (Bp, H)
    # TODO(synk): if batch grows, pad wfc to (H, 128) zero columns for a lane-dense store.
    tag_space = (jnp.dot(averaged, wfc_ref[...],
                         preferred_element_type=jnp.float32)
                 + bfc_ref[...])                                # (Bp, O)

    # log_softmax over dim=1.
    m = jnp.max(tag_space, axis=1, keepdims=True)
    z = tag_space - m
    lse = jnp.log(jnp.sum(jnp.exp(z), axis=1, keepdims=True))
    out_ref[...] = z - lse


# ------------------------------ wrapper --------------------------------------
@jax.jit
def tagger_forward(sentence, lengths, kparams):
    """sentence: (B, T) int32 token ids (0 = pad); lengths: (B,) int32."""
    B, T = sentence.shape
    gtab = kparams["gtab"]                  # (V, 4H) precomputed gate table
    whh_s = kparams["whh_s"]                # (H, 4H)
    H = whh_s.shape[0]
    O = kparams["wfc_t"].shape[1]

    # Pad batch to the 8-sublane granularity so the recurrence runs on full vregs.
    B_pad = ((B + 7) // 8) * 8
    pad = B_pad - B

    # torch.t(sentence) -> (T, B); embedding + input projection = one table gather.
    sent_t = jnp.transpose(sentence)                           # (T, B)
    sent_t = jnp.pad(sent_t, ((0, 0), (0, pad)))               # dummy rows use pad token 0
    gx = jnp.take(gtab, sent_t, axis=0)                        # (T, B_pad, 4H)
    gx_flat = gx.reshape(T * B_pad, 4 * H)                     # row t*B_pad + b

    lens_f = lengths.astype(jnp.float32)
    inv_len = jnp.pad(1.0 / lens_f, (0, pad),
                      constant_values=1.0).reshape(B_pad, 1)   # exact divide in XLA glue
    lens_mask = jnp.pad(lens_f, (0, pad))                      # dummy rows -> length 0
    valid = (jnp.arange(T, dtype=jnp.float32)[:, None]
             < lens_mask[None, :]).astype(jnp.float32)         # (T, B_pad)
    mask_full = jnp.broadcast_to(valid[:, :, None],
                                 (T, B_pad, H)).reshape(T * B_pad, H)

    vmem = pl.BlockSpec(memory_space=pltpu.MemorySpace.VMEM)
    # TODO(synk): for large B on v7x, add a batch-chunk grid (blocks of Bp rows) with
    # dimension_semantics=("parallel",) to engage both TensorCores, sizing blocks for the
    # 32 MiB scoped VMEM there; on v5e/v6e keep larger single blocks (128 MiB VMEM).
    out_padded = pl.pallas_call(
        _lstm_tagger_kernel,
        out_shape=jax.ShapeDtypeStruct((B_pad, O), jnp.float32),
        in_specs=[vmem] * 6,
        out_specs=vmem,
    )(gx_flat, mask_full, inv_len, whh_s, kparams["wfc_t"], kparams["bfc"])
    return out_padded[:B]


# ------------------------- deterministic params ------------------------------
def make_params(key, n_embeds, embedding_dim, hidden_dim, output_dim):
    """Raw (PyTorch-layout-equivalent) parameters used by the pure-JAX reference."""
    ks = jax.random.split(key, 7)
    scale = 1.0 / jnp.sqrt(hidden_dim)
    emb = jax.random.normal(ks[0], (n_embeds, embedding_dim), jnp.float32)
    emb = emb.at[0].set(0.0)                                # padding_idx=0
    w_ih = jax.random.uniform(ks[1], (4 * hidden_dim, embedding_dim), jnp.float32, -scale, scale)
    w_hh = jax.random.uniform(ks[2], (4 * hidden_dim, hidden_dim), jnp.float32, -scale, scale)
    b_ih = jax.random.uniform(ks[3], (4 * hidden_dim,), jnp.float32, -scale, scale)
    b_hh = jax.random.uniform(ks[4], (4 * hidden_dim,), jnp.float32, -scale, scale)
    fc_scale = 1.0 / jnp.sqrt(hidden_dim)
    w_fc = jax.random.uniform(ks[5], (output_dim, hidden_dim), jnp.float32, -fc_scale, fc_scale)
    b_fc = jax.random.uniform(ks[6], (output_dim,), jnp.float32, -fc_scale, fc_scale)
    return {
        "emb": emb,                            # (V, E)
        "wih_t": w_ih.T,                       # (E, 4H)
        "whh_t": w_hh.T,                       # (H, 4H)
        "b": (b_ih + b_hh).reshape(1, -1),     # (1, 4H)
        "wfc_t": w_fc.T,                       # (H, O)
        "bfc": b_fc.reshape(1, -1),            # (1, O)
    }


def make_kernel_params(params):
    """Kernel-ready parameters: embedding+input-projection folded into a gate table,
    g-gate columns pre-scaled by 2 (exact) so tanh(g) = 2*sigmoid(2g) - 1 in the kernel."""
    H = params["whh_t"].shape[0]
    gscale = jnp.ones((1, 4 * H), jnp.float32).at[:, 2 * H:3 * H].set(2.0)
    gtab = (params["emb"] @ params["wih_t"] + params["b"]) * gscale     # (V, 4H)
    whh_s = params["whh_t"] * gscale                                    # (H, 4H)
    # TODO(synk): bf16 variant of gtab/whh_s/wfc for a large-H model (keep state f32).
    return {
        "gtab": gtab,
        "whh_s": whh_s,
        "wfc_t": params["wfc_t"],
        "bfc": params["bfc"],
    }


# ------------------------------ reference ------------------------------------
def tagger_reference(sentence, lengths, params):
    """Pure-JAX reference mirroring the PyTorch forward (eval, num_layers=1)."""
    B, T = sentence.shape
    H = params["whh_t"].shape[0]
    sent_t = jnp.transpose(sentence)
    embeds = jnp.take(params["emb"], sent_t, axis=0)       # (T, B, E)

    def step(carry, x_t):
        h, c = carry
        gates = x_t @ params["wih_t"] + h @ params["whh_t"] + params["b"]
        i = jax.nn.sigmoid(gates[:, 0 * H:1 * H])
        f = jax.nn.sigmoid(gates[:, 1 * H:2 * H])
        g = jnp.tanh(gates[:, 2 * H:3 * H])
        o = jax.nn.sigmoid(gates[:, 3 * H:4 * H])
        c = f * c + i * g
        h = o * jnp.tanh(c)
        return (h, c), h

    h0 = jnp.zeros((B, H), jnp.float32)
    _, hs = lax.scan(step, (h0, h0), embeds)               # (T, B, H)
    mask = (jnp.arange(T)[:, None] < lengths[None, :]).astype(jnp.float32)  # (T, B)
    summed = jnp.sum(hs * mask[:, :, None], axis=0)        # (B, H)
    averaged = summed / lengths.astype(jnp.float32)[:, None]
    tag_space = averaged @ params["wfc_t"] + params["bfc"]
    return jax.nn.log_softmax(tag_space, axis=1)


# --------------------------------- main ---------------------------------------
if __name__ == "__main__":
    # Model hyper-parameters (num_layers=1 => dropout=0, matching eval semantics)
    num_layers = 1          # TODO(synk): multi-layer LSTM stacking not implemented (num_layers>1)
    embedding_dim = 16
    hidden_dim = 32
    batch_size = 4
    n_embeds = 64
    output_dim = 3
    seq_len = 8

    key = jax.random.PRNGKey(0)
    k_par, k_tok = jax.random.split(key)
    params = make_params(k_par, n_embeds, embedding_dim, hidden_dim, output_dim)
    kparams = make_kernel_params(params)

    # Sorted-descending lengths with trailing padding (pack_padded_sequence convention)
    lengths = jnp.array([8, 6, 5, 3], dtype=jnp.int32)
    tokens = jax.random.randint(k_tok, (batch_size, seq_len), 1, n_embeds, dtype=jnp.int32)
    pad_mask = (jnp.arange(seq_len)[None, :] < lengths[:, None])
    sentence = jnp.where(pad_mask, tokens, 0)              # (B, T) with 0-padding

    out = tagger_forward(sentence, lengths, kparams)
    out = jax.block_until_ready(out)

    ref = tagger_reference(sentence, lengths, params)
    assert out.shape == (batch_size, output_dim)
    assert jnp.allclose(out, ref, atol=1e-5, rtol=1e-5), (out, ref)

    print("KERNEL_OK")
</pallas_src>

<mosaic_0001>
module attributes {stable_mosaic.version = 11 : i64} {
  func.func @_lstm_tagger_kernel(%arg0: memref<64x128xf32, #tpu.memory_space<vmem>>, %arg1: memref<64x32xf32, #tpu.memory_space<vmem>>, %arg2: memref<8x1xf32, #tpu.memory_space<vmem>>, %arg3: memref<32x128xf32, #tpu.memory_space<vmem>>, %arg4: memref<32x3xf32, #tpu.memory_space<vmem>>, %arg5: memref<1x3xf32, #tpu.memory_space<vmem>>, %arg6: memref<8x3xf32, #tpu.memory_space<vmem>>) attributes {dimension_semantics = [], scalar_prefetch = 0 : i64, scratch_operands = 0 : i64, tpu.core_type = #tpu.core_type<tc>} {
    %c0 = arith.constant 0 : index
    %c0_0 = arith.constant 0 : index
    %0 = vector.load %arg3[%c0, %c0_0] : memref<32x128xf32, #tpu.memory_space<vmem>>, vector<32x128xf32>
    %c0_1 = arith.constant 0 : index
    %c0_2 = arith.constant 0 : index
    %1 = vector.load %arg0[%c0_1, %c0_2] : memref<64x128xf32, #tpu.memory_space<vmem>>, vector<64x128xf32>
    %c0_3 = arith.constant 0 : index
    %c0_4 = arith.constant 0 : index
    %2 = vector.load %arg1[%c0_3, %c0_4] : memref<64x32xf32, #tpu.memory_space<vmem>>, vector<64x32xf32>
    %cst = arith.constant 0.000000e+00 : f32
    %3 = vector.broadcast %cst : f32 to vector<8x32xf32>
    %cst_5 = arith.constant 0.000000e+00 : f32
    %4 = vector.broadcast %cst_5 : f32 to vector<8x32xf32>
    %cst_6 = arith.constant 0.000000e+00 : f32
    %5 = vector.broadcast %cst_6 : f32 to vector<8x32xf32>
    %6 = vector.extract_strided_slice %1 {offsets = [0, 0], sizes = [8, 128], strides = [1, 1]} : vector<64x128xf32> to vector<8x128xf32>
    %cst_7 = arith.constant dense<0.000000e+00> : vector<8x128xf32>
    %7 = tpu.matmul %3, %0, %cst_7 {dimension_numbers = #tpu.dot_dimension_numbers<[1], [0], [0], [1], [0, 0, 1, 1], [], []>} : vector<8x32xf32>, vector<32x128xf32>, vector<8x128xf32> -> vector<8x128xf32>
    %8 = arith.addf %6, %7 : vector<8x128xf32>
    %9 = arith.negf %8 : vector<8x128xf32>
    %10 = math.exp %9 : vector<8x128xf32>
    %cst_8 = arith.constant 1.000000e+00 : f32
    %11 = vector.broadcast %cst_8 : f32 to vector<8x128xf32>
    %12 = arith.addf %11, %10 : vector<8x128xf32>
    %13 = arith.divf %11, %12 : vector<8x128xf32>
    %14 = vector.extract_strided_slice %13 {offsets = [0, 0], sizes = [8, 32], strides = [1, 1]} : vector<8x128xf32> to vector<8x32xf32>
    %15 = vector.extract_strided_slice %13 {offsets = [0, 32], sizes = [8, 32], strides = [1, 1]} : vector<8x128xf32> to vector<8x32xf32>
    %16 = vector.extract_strided_slice %13 {offsets = [0, 64], sizes = [8, 32], strides = [1, 1]} : vector<8x128xf32> to vector<8x32xf32>
    %cst_9 = arith.constant 2.000000e+00 : f32
    %17 = vector.broadcast %cst_9 : f32 to vector<8x32xf32>
    %18 = arith.mulf %17, %16 : vector<8x32xf32>
    %cst_10 = arith.constant 1.000000e+00 : f32
    %19 = vector.broadcast %cst_10 : f32 to vector<8x32xf32>
    %20 = arith.subf %18, %19 : vector<8x32xf32>
    %21 = vector.extract_strided_slice %13 {offsets = [0, 96], sizes = [8, 32], strides = [1, 1]} : vector<8x128xf32> to vector<8x32xf32>
    %22 = arith.mulf %15, %4 : vector<8x32xf32>
    %23 = arith.mulf %14, %20 : vector<8x32xf32>
    %24 = arith.addf %22, %23 : vector<8x32xf32>
    %25 = math.tanh %24 : vector<8x32xf32>
    %26 = arith.mulf %21, %25 : vector<8x32xf32>
    %27 = vector.extract_strided_slice %2 {offsets = [0, 0], sizes = [8, 32], strides = [1, 1]} : vector<64x32xf32> to vector<8x32xf32>
    %28 = arith.mulf %26, %27 : vector<8x32xf32>
    %29 = arith.addf %5, %28 : vector<8x32xf32>
    %30 = vector.extract_strided_slice %1 {offsets = [8, 0], sizes = [8, 128], strides = [1, 1]} : vector<64x128xf32> to vector<8x128xf32>
    %cst_11 = arith.constant dense<0.000000e+00> : vector<8x128xf32>
    %31 = tpu.matmul %26, %0, %cst_11 {dimension_numbers = #tpu.dot_dimension_numbers<[1], [0], [0], [1], [0, 0, 1, 1], [], []>} : vector<8x32xf32>, vector<32x128xf32>, vector<8x128xf32> -> vector<8x128xf32>
    %32 = arith.addf %30, %31 : vector<8x128xf32>
    %33 = arith.negf %32 : vector<8x128xf32>
    %34 = math.exp %33 : vector<8x128xf32>
    %cst_12 = arith.constant 1.000000e+00 : f32
    %35 = vector.broadcast %cst_12 : f32 to vector<8x128xf32>
    %36 = arith.addf %35, %34 : vector<8x128xf32>
    %37 = arith.divf %35, %36 : vector<8x128xf32>
    %38 = vector.extract_strided_slice %37 {offsets = [0, 0], sizes = [8, 32], strides = [1, 1]} : vector<8x128xf32> to vector<8x32xf32>
    %39 = vector.extract_strided_slice %37 {offsets = [0, 32], sizes = [8, 32], strides = [1, 1]} : vector<8x128xf32> to vector<8x32xf32>
    %40 = vector.extract_strided_slice %37 {offsets = [0, 64], sizes = [8, 32], strides = [1, 1]} : vector<8x128xf32> to vector<8x32xf32>
    %cst_13 = arith.constant 2.000000e+00 : f32
    %41 = vector.broadcast %cst_13 : f32 to vector<8x32xf32>
    %42 = arith.mulf %41, %40 : vector<8x32xf32>
    %cst_14 = arith.constant 1.000000e+00 : f32
    %43 = vector.broadcast %cst_14 : f32 to vector<8x32xf32>
    %44 = arith.subf %42, %43 : vector<8x32xf32>
    %45 = vector.extract_strided_slice %37 {offsets = [0, 96], sizes = [8, 32], strides = [1, 1]} : vector<8x128xf32> to vector<8x32xf32>
    %46 = arith.mulf %39, %24 : vector<8x32xf32>
    %47 = arith.mulf %38, %44 : vector<8x32xf32>
    %48 = arith.addf %46, %47 : vector<8x32xf32>
    %49 = math.tanh %48 : vector<8x32xf32>
    %50 = arith.mulf %45, %49 : vector<8x32xf32>
    %51 = vector.extract_strided_slice %2 {offsets = [8, 0], sizes = [8, 32], strides = [1, 1]} : vector<64x32xf32> to vector<8x32xf32>
    %52 = arith.mulf %50, %51 : vector<8x32xf32>
    %53 = arith.addf %29, %52 : vector<8x32xf32>
    %54 = vector.extract_strided_slice %1 {offsets = [16, 0], sizes = [8, 128], strides = [1, 1]} : vector<64x128xf32> to vector<8x128xf32>
    %cst_15 = arith.constant dense<0.000000e+00> : vector<8x128xf32>
    %55 = tpu.matmul %50, %0, %cst_15 {dimension_numbers = #tpu.dot_dimension_numbers<[1], [0], [0], [1], [0, 0, 1, 1], [], []>} : vector<8x32xf32>, vector<32x128xf32>, vector<8x128xf32> -> vector<8x128xf32>
    %56 = arith.addf %54, %55 : vector<8x128xf32>
    %57 = arith.negf %56 : vector<8x128xf32>
    %58 = math.exp %57 : vector<8x128xf32>
    %cst_16 = arith.constant 1.000000e+00 : f32
    %59 = vector.broadcast %cst_16 : f32 to vector<8x128xf32>
    %60 = arith.addf %59, %58 : vector<8x128xf32>
    %61 = arith.divf %59, %60 : vector<8x128xf32>
    %62 = vector.extract_strided_slice %61 {offsets = [0, 0], sizes = [8, 32], strides = [1, 1]} : vector<8x128xf32> to vector<8x32xf32>
    %63 = vector.extract_strided_slice %61 {offsets = [0, 32], sizes = [8, 32], strides = [1, 1]} : vector<8x128xf32> to vector<8x32xf32>
    %64 = vector.extract_strided_slice %61 {offsets = [0, 64], sizes = [8, 32], strides = [1, 1]} : vector<8x128xf32> to vector<8x32xf32>
    %cst_17 = arith.constant 2.000000e+00 : f32
    %65 = vector.broadcast %cst_17 : f32 to vector<8x32xf32>
    %66 = arith.mulf %65, %64 : vector<8x32xf32>
    %cst_18 = arith.constant 1.000000e+00 : f32
    %67 = vector.broadcast %cst_18 : f32 to vector<8x32xf32>
    %68 = arith.subf %66, %67 : vector<8x32xf32>
    %69 = vector.extract_strided_slice %61 {offsets = [0, 96], sizes = [8, 32], strides = [1, 1]} : vector<8x128xf32> to vector<8x32xf32>
    %70 = arith.mulf %63, %48 : vector<8x32xf32>
    %71 = arith.mulf %62, %68 : vector<8x32xf32>
    %72 = arith.addf %70, %71 : vector<8x32xf32>
    %73 = math.tanh %72 : vector<8x32xf32>
    %74 = arith.mulf %69, %73 : vector<8x32xf32>
    %75 = vector.extract_strided_slice %2 {offsets = [16, 0], sizes = [8, 32], strides = [1, 1]} : vector<64x32xf32> to vector<8x32xf32>
    %76 = arith.mulf %74, %75 : vector<8x32xf32>
    %77 = arith.addf %53, %76 : vector<8x32xf32>
    %78 = vector.extract_strided_slice %1 {offsets = [24, 0], sizes = [8, 128], strides = [1, 1]} : vector<64x128xf32> to vector<8x128xf32>
    %cst_19 = arith.constant dense<0.000000e+00> : vector<8x128xf32>
    %79 = tpu.matmul %74, %0, %cst_19 {dimension_numbers = #tpu.dot_dimension_numbers<[1], [0], [0], [1], [0, 0, 1, 1], [], []>} : vector<8x32xf32>, vector<32x128xf32>, vector<8x128xf32> -> vector<8x128xf32>
    %80 = arith.addf %78, %79 : vector<8x128xf32>
    %81 = arith.negf %80 : vector<8x128xf32>
    %82 = math.exp %81 : vector<8x128xf32>
    %cst_20 = arith.constant 1.000000e+00 : f32
    %83 = vector.broadcast %cst_20 : f32 to vector<8x128xf32>
    %84 = arith.addf %83, %82 : vector<8x128xf32>
    %85 = arith.divf %83, %84 : vector<8x128xf32>
    %86 = vector.extract_strided_slice %85 {offsets = [0, 0], sizes = [8, 32], strides = [1, 1]} : vector<8x128xf32> to vector<8x32xf32>
    %87 = vector.extract_strided_slice %85 {offsets = [0, 32], sizes = [8, 32], strides = [1, 1]} : vector<8x128xf32> to vector<8x32xf32>
    %88 = vector.extract_strided_slice %85 {offsets = [0, 64], sizes = [8, 32], strides = [1, 1]} : vector<8x128xf32> to vector<8x32xf32>
    %cst_21 = arith.constant 2.000000e+00 : f32
    %89 = vector.broadcast %cst_21 : f32 to vector<8x32xf32>
    %90 = arith.mulf %89, %88 : vector<8x32xf32>
    %cst_22 = arith.constant 1.000000e+00 : f32
    %91 = vector.broadcast %cst_22 : f32 to vector<8x32xf32>
    %92 = arith.subf %90, %91 : vector<8x32xf32>
    %93 = vector.extract_strided_slice %85 {offsets = [0, 96], sizes = [8, 32], strides = [1, 1]} : vector<8x128xf32> to vector<8x32xf32>
    %94 = arith.mulf %87, %72 : vector<8x32xf32>
    %95 = arith.mulf %86, %92 : vector<8x32xf32>
    %96 = arith.addf %94, %95 : vector<8x32xf32>
    %97 = math.tanh %96 : vector<8x32xf32>
    %98 = arith.mulf %93, %97 : vector<8x32xf32>
    %99 = vector.extract_strided_slice %2 {offsets = [24, 0], sizes = [8, 32], strides = [1, 1]} : vector<64x32xf32> to vector<8x32xf32>
    %100 = arith.mulf %98, %99 : vector<8x32xf32>
    %101 = arith.addf %77, %100 : vector<8x32xf32>
    %102 = vector.extract_strided_slice %1 {offsets = [32, 0], sizes = [8, 128], strides = [1, 1]} : vector<64x128xf32> to vector<8x128xf32>
    %cst_23 = arith.constant dense<0.000000e+00> : vector<8x128xf32>
    %103 = tpu.matmul %98, %0, %cst_23 {dimension_numbers = #tpu.dot_dimension_numbers<[1], [0], [0], [1], [0, 0, 1, 1], [], []>} : vector<8x32xf32>, vector<32x128xf32>, vector<8x128xf32> -> vector<8x128xf32>
    %104 = arith.addf %102, %103 : vector<8x128xf32>
    %105 = arith.negf %104 : vector<8x128xf32>
    %106 = math.exp %105 : vector<8x128xf32>
    %cst_24 = arith.constant 1.000000e+00 : f32
    %107 = vector.broadcast %cst_24 : f32 to vector<8x128xf32>
    %108 = arith.addf %107, %106 : vector<8x128xf32>
    %109 = arith.divf %107, %108 : vector<8x128xf32>
    %110 = vector.extract_strided_slice %109 {offsets = [0, 0], sizes = [8, 32], strides = [1, 1]} : vector<8x128xf32> to vector<8x32xf32>
    %111 = vector.extract_strided_slice %109 {offsets = [0, 32], sizes = [8, 32], strides = [1, 1]} : vector<8x128xf32> to vector<8x32xf32>
    %112 = vector.extract_strided_slice %109 {offsets = [0, 64], sizes = [8, 32], strides = [1, 1]} : vector<8x128xf32> to vector<8x32xf32>
    %cst_25 = arith.constant 2.000000e+00 : f32
    %113 = vector.broadcast %cst_25 : f32 to vector<8x32xf32>
    %114 = arith.mulf %113, %112 : vector<8x32xf32>
    %cst_26 = arith.constant 1.000000e+00 : f32
    %115 = vector.broadcast %cst_26 : f32 to vector<8x32xf32>
    %116 = arith.subf %114, %115 : vector<8x32xf32>
    %117 = vector.extract_strided_slice %109 {offsets = [0, 96], sizes = [8, 32], strides = [1, 1]} : vector<8x128xf32> to vector<8x32xf32>
    %118 = arith.mulf %111, %96 : vector<8x32xf32>
    %119 = arith.mulf %110, %116 : vector<8x32xf32>
    %120 = arith.addf %118, %119 : vector<8x32xf32>
    %121 = math.tanh %120 : vector<8x32xf32>
    %122 = arith.mulf %117, %121 : vector<8x32xf32>
    %123 = vector.extract_strided_slice %2 {offsets = [32, 0], sizes = [8, 32], strides = [1, 1]} : vector<64x32xf32> to vector<8x32xf32>
    %124 = arith.mulf %122, %123 : vector<8x32xf32>
    %125 = arith.addf %101, %124 : vector<8x32xf32>
    %126 = vector.extract_strided_slice %1 {offsets = [40, 0], sizes = [8, 128], strides = [1, 1]} : vector<64x128xf32> to vector<8x128xf32>
    %cst_27 = arith.constant dense<0.000000e+00> : vector<8x128xf32>
    %127 = tpu.matmul %122, %0, %cst_27 {dimension_numbers = #tpu.dot_dimension_numbers<[1], [0], [0], [1], [0, 0, 1, 1], [], []>} : vector<8x32xf32>, vector<32x128xf32>, vector<8x128xf32> -> vector<8x128xf32>
    %128 = arith.addf %126, %127 : vector<8x128xf32>
    %129 = arith.negf %128 : vector<8x128xf32>
    %130 = math.exp %129 : vector<8x128xf32>
    %cst_28 = arith.constant 1.000000e+00 : f32
    %131 = vector.broadcast %cst_28 : f32 to vector<8x128xf32>
    %132 = arith.addf %131, %130 : vector<8x128xf32>
    %133 = arith.divf %131, %132 : vector<8x128xf32>
    %134 = vector.extract_strided_slice %133 {offsets = [0, 0], sizes = [8, 32], strides = [1, 1]} : vector<8x128xf32> to vector<8x32xf32>
    %135 = vector.extract_strided_slice %133 {offsets = [0, 32], sizes = [8, 32], strides = [1, 1]} : vector<8x128xf32> to vector<8x32xf32>
    %136 = vector.extract_strided_slice %133 {offsets = [0, 64], sizes = [8, 32], strides = [1, 1]} : vector<8x128xf32> to vector<8x32xf32>
    %cst_29 = arith.constant 2.000000e+00 : f32
    %137 = vector.broadcast %cst_29 : f32 to vector<8x32xf32>
    %138 = arith.mulf %137, %136 : vector<8x32xf32>
    %cst_30 = arith.constant 1.000000e+00 : f32
    %139 = vector.broadcast %cst_30 : f32 to vector<8x32xf32>
    %140 = arith.subf %138, %139 : vector<8x32xf32>
    %141 = vector.extract_strided_slice %133 {offsets = [0, 96], sizes = [8, 32], strides = [1, 1]} : vector<8x128xf32> to vector<8x32xf32>
    %142 = arith.mulf %135, %120 : vector<8x32xf32>
    %143 = arith.mulf %134, %140 : vector<8x32xf32>
    %144 = arith.addf %142, %143 : vector<8x32xf32>
    %145 = math.tanh %144 : vector<8x32xf32>
    %146 = arith.mulf %141, %145 : vector<8x32xf32>
    %147 = vector.extract_strided_slice %2 {offsets = [40, 0], sizes = [8, 32], strides = [1, 1]} : vector<64x32xf32> to vector<8x32xf32>
    %148 = arith.mulf %146, %147 : vector<8x32xf32>
    %149 = arith.addf %125, %148 : vector<8x32xf32>
    %150 = vector.extract_strided_slice %1 {offsets = [48, 0], sizes = [8, 128], strides = [1, 1]} : vector<64x128xf32> to vector<8x128xf32>
    %cst_31 = arith.constant dense<0.000000e+00> : vector<8x128xf32>
    %151 = tpu.matmul %146, %0, %cst_31 {dimension_numbers = #tpu.dot_dimension_numbers<[1], [0], [0], [1], [0, 0, 1, 1], [], []>} : vector<8x32xf32>, vector<32x128xf32>, vector<8x128xf32> -> vector<8x128xf32>
    %152 = arith.addf %150, %151 : vector<8x128xf32>
    %153 = arith.negf %152 : vector<8x128xf32>
    %154 = math.exp %153 : vector<8x128xf32>
    %cst_32 = arith.constant 1.000000e+00 : f32
    %155 = vector.broadcast %cst_32 : f32 to vector<8x128xf32>
    %156 = arith.addf %155, %154 : vector<8x128xf32>
    %157 = arith.divf %155, %156 : vector<8x128xf32>
    %158 = vector.extract_strided_slice %157 {offsets = [0, 0], sizes = [8, 32], strides = [1, 1]} : vector<8x128xf32> to vector<8x32xf32>
    %159 = vector.extract_strided_slice %157 {offsets = [0, 32], sizes = [8, 32], strides = [1, 1]} : vector<8x128xf32> to vector<8x32xf32>
    %160 = vector.extract_strided_slice %157 {offsets = [0, 64], sizes = [8, 32], strides = [1, 1]} : vector<8x128xf32> to vector<8x32xf32>
    %cst_33 = arith.constant 2.000000e+00 : f32
    %161 = vector.broadcast %cst_33 : f32 to vector<8x32xf32>
    %162 = arith.mulf %161, %160 : vector<8x32xf32>
    %cst_34 = arith.constant 1.000000e+00 : f32
    %163 = vector.broadcast %cst_34 : f32 to vector<8x32xf32>
    %164 = arith.subf %162, %163 : vector<8x32xf32>
    %165 = vector.extract_strided_slice %157 {offsets = [0, 96], sizes = [8, 32], strides = [1, 1]} : vector<8x128xf32> to vector<8x32xf32>
    %166 = arith.mulf %159, %144 : vector<8x32xf32>
    %167 = arith.mulf %158, %164 : vector<8x32xf32>
    %168 = arith.addf %166, %167 : vector<8x32xf32>
    %169 = math.tanh %168 : vector<8x32xf32>
    %170 = arith.mulf %165, %169 : vector<8x32xf32>
    %171 = vector.extract_strided_slice %2 {offsets = [48, 0], sizes = [8, 32], strides = [1, 1]} : vector<64x32xf32> to vector<8x32xf32>
    %172 = arith.mulf %170, %171 : vector<8x32xf32>
    %173 = arith.addf %149, %172 : vector<8x32xf32>
    %174 = vector.extract_strided_slice %1 {offsets = [56, 0], sizes = [8, 128], strides = [1, 1]} : vector<64x128xf32> to vector<8x128xf32>
    %cst_35 = arith.constant dense<0.000000e+00> : vector<8x128xf32>
    %175 = tpu.matmul %170, %0, %cst_35 {dimension_numbers = #tpu.dot_dimension_numbers<[1], [0], [0], [1], [0, 0, 1, 1], [], []>} : vector<8x32xf32>, vector<32x128xf32>, vector<8x128xf32> -> vector<8x128xf32>
    %176 = arith.addf %174, %175 : vector<8x128xf32>
    %177 = arith.negf %176 : vector<8x128xf32>
    %178 = math.exp %177 : vector<8x128xf32>
    %cst_36 = arith.constant 1.000000e+00 : f32
    %179 = vector.broadcast %cst_36 : f32 to vector<8x128xf32>
    %180 = arith.addf %179, %178 : vector<8x128xf32>
    %181 = arith.divf %179, %180 : vector<8x128xf32>
    %182 = vector.extract_strided_slice %181 {offsets = [0, 0], sizes = [8, 32], strides = [1, 1]} : vector<8x128xf32> to vector<8x32xf32>
    %183 = vector.extract_strided_slice %181 {offsets = [0, 32], sizes = [8, 32], strides = [1, 1]} : vector<8x128xf32> to vector<8x32xf32>
    %184 = vector.extract_strided_slice %181 {offsets = [0, 64], sizes = [8, 32], strides = [1, 1]} : vector<8x128xf32> to vector<8x32xf32>
    %cst_37 = arith.constant 2.000000e+00 : f32
    %185 = vector.broadcast %cst_37 : f32 to vector<8x32xf32>
    %186 = arith.mulf %185, %184 : vector<8x32xf32>
    %cst_38 = arith.constant 1.000000e+00 : f32
    %187 = vector.broadcast %cst_38 : f32 to vector<8x32xf32>
    %188 = arith.subf %186, %187 : vector<8x32xf32>
    %189 = vector.extract_strided_slice %181 {offsets = [0, 96], sizes = [8, 32], strides = [1, 1]} : vector<8x128xf32> to vector<8x32xf32>
    %190 = arith.mulf %183, %168 : vector<8x32xf32>
    %191 = arith.mulf %182, %188 : vector<8x32xf32>
    %192 = arith.addf %190, %191 : vector<8x32xf32>
    %193 = math.tanh %192 : vector<8x32xf32>
    %194 = arith.mulf %189, %193 : vector<8x32xf32>
    %195 = vector.extract_strided_slice %2 {offsets = [56, 0], sizes = [8, 32], strides = [1, 1]} : vector<64x32xf32> to vector<8x32xf32>
    %196 = arith.mulf %194, %195 : vector<8x32xf32>
    %197 = arith.addf %173, %196 : vector<8x32xf32>
    %c0_39 = arith.constant 0 : index
    %c0_40 = arith.constant 0 : index
    %198 = vector.load %arg2[%c0_39, %c0_40] : memref<8x1xf32, #tpu.memory_space<vmem>>, vector<8x1xf32>
    %199 = vector.broadcast %198 : vector<8x1xf32> to vector<8x32xf32>
    %200 = arith.mulf %197, %199 : vector<8x32xf32>
    %c0_41 = arith.constant 0 : index
    %c0_42 = arith.constant 0 : index
    %201 = vector.load %arg4[%c0_41, %c0_42] : memref<32x3xf32, #tpu.memory_space<vmem>>, vector<32x3xf32>
    %cst_43 = arith.constant dense<0.000000e+00> : vector<8x3xf32>
    %202 = tpu.matmul %200, %201, %cst_43 {dimension_numbers = #tpu.dot_dimension_numbers<[1], [0], [0], [1], [0, 0, 1, 1], [], []>} : vector<8x32xf32>, vector<32x3xf32>, vector<8x3xf32> -> vector<8x3xf32>
    %c0_44 = arith.constant 0 : index
    %c0_45 = arith.constant 0 : index
    %203 = vector.load %arg5[%c0_44, %c0_45] : memref<1x3xf32, #tpu.memory_space<vmem>>, vector<1x3xf32>
    %204 = vector.broadcast %203 : vector<1x3xf32> to vector<8x3xf32>
    %205 = arith.addf %202, %204 : vector<8x3xf32>
    %cst_46 = arith.constant dense<0xFF800000> : vector<8xf32>
    %206 = vector.multi_reduction <maximumf>, %205, %cst_46 [1] : vector<8x3xf32> to vector<8xf32>
    %207 = vector.shape_cast %206 : vector<8xf32> to vector<8x1xf32>
    %208 = vector.broadcast %207 : vector<8x1xf32> to vector<8x3xf32>
    %209 = arith.subf %205, %208 : vector<8x3xf32>
    %210 = math.exp %209 : vector<8x3xf32>
    %cst_47 = arith.constant dense<0.000000e+00> : vector<8xf32>
    %211 = vector.multi_reduction <add>, %210, %cst_47 [1] : vector<8x3xf32> to vector<8xf32>
    %212 = vector.shape_cast %211 : vector<8xf32> to vector<8x1xf32>
    %213 = math.log %212 : vector<8x1xf32>
    %214 = vector.broadcast %213 : vector<8x1xf32> to vector<8x3xf32>
    %215 = arith.subf %209, %214 : vector<8x3xf32>
    %c0_48 = arith.constant 0 : index
    %c0_49 = arith.constant 0 : index
    %216 = vector.load %arg6[%c0_48, %c0_49] : memref<8x3xf32, #tpu.memory_space<vmem>>, vector<8x3xf32>
    tpu.vector_store %arg6[%c0_48, %c0_49], %215 {strides = array<i32>} : memref<8x3xf32, #tpu.memory_space<vmem>>, vector<8x3xf32>,
    return
  }
}

</mosaic_0001>

<llo_original>
// kernel: tagger_forward.1
$region0: #{tagger_forward.1}
  #allocation0 [shape = 'u32[]', space=smem, size = 0x4, offset = 0x4, fixed_abs, tag = 'smem constant byte address 0x4 - core index']
  #allocation1 [shape = 'u32[144,128]{1,0:T(1,128)}', space=vmem, size = 0x12000, scoped, tag = 'internal scratch']
  %s0 = inlined_call_operand.vmem [shape: f32[64,128], index: 0, kind: input, shape index: {}]
  %s1 = inlined_call_operand.vmem [shape: f32[64,32], index: 1, kind: input, shape index: {}]
  %s2 = inlined_call_operand.vmem [shape: f32[8,1], index: 2, kind: input, shape index: {}]
  %s3 = inlined_call_operand.vmem [shape: f32[32,128], index: 3, kind: input, shape index: {}]
  %s4 = inlined_call_operand.vmem [shape: f32[32,3], index: 4, kind: input, shape index: {}]
  %s5 = inlined_call_operand.vmem [shape: f32[1,3], index: 5, kind: input, shape index: {}]
  %s6 = inlined_call_operand.vmem [shape: f32[8,3], index: 6, kind: output, shape index: {}]
  %s7 = sld [smem:[#allocation0]]
  $region34: #{tagger_forward.1} parent=0
    _
  %s9 = ssub.s32 1, %s7
  %s10 = scalar_select 0, %s9, %s7
  // Predicated region
  $region2: #{tagger_forward.1} parent=0 // pred_check
    _
  $region3: #{tagger_forward.1} parent=0 // pred_check_branch
    %12 = sbr.rel (0) target = $region5
  $region4: #{tagger_forward.1} parent=0 // pred_region
    _
  $region5: #{tagger_forward.1} parent=0 // pred_fallthru
    _
  // Predicated region
  $region6: #{tagger_forward.1} parent=0 // pred_check
    _
  $region7: #{tagger_forward.1} parent=0 // pred_check_branch
    %14 = sbr.rel (0) target = $region9
  $region8: #{tagger_forward.1} parent=0 // pred_region
    _
  $region9: #{tagger_forward.1} parent=0 // pred_fallthru
    _
  // Predicated region
  $region10: #{tagger_forward.1} parent=0 // pred_check
    _
  $region11: #{tagger_forward.1} parent=0 // pred_check_branch
    %16 = sbr.rel (0) target = $region13
  $region12: #{tagger_forward.1} parent=0 // pred_region
    _
  $region13: #{tagger_forward.1} parent=0 // pred_fallthru
    _
  // Predicated region
  $region14: #{tagger_forward.1} parent=0 // pred_check
    _
  $region15: #{tagger_forward.1} parent=0 // pred_check_branch
    %18 = sbr.rel (0) target = $region17
  $region16: #{tagger_forward.1} parent=0 // pred_region
    _
  $region17: #{tagger_forward.1} parent=0 // pred_fallthru
    _
  // Predicated region
  $region18: #{tagger_forward.1} parent=0 // pred_check
    _
  $region19: #{tagger_forward.1} parent=0 // pred_check_branch
    %20 = sbr.rel (0) target = $region21
  $region20: #{tagger_forward.1} parent=0 // pred_region
    _
  $region21: #{tagger_forward.1} parent=0 // pred_fallthru
    _
  // Predicated region
  $region22: #{tagger_forward.1} parent=0 // pred_check
    _
  $region23: #{tagger_forward.1} parent=0 // pred_check_branch
    %22 = sbr.rel (0) target = $region25
  $region24: #{tagger_forward.1} parent=0 // pred_region
    _
  $region25: #{tagger_forward.1} parent=0 // pred_fallthru
    _
  %v23 = vld [vmem:[%s3] sm:$0xff]
  %v24 = vld [vmem:[%s3 + $0x8] sm:$0xff]
  %v25 = vld [vmem:[%s3 + $0x10] sm:$0xff]
  %v26 = vld [vmem:[%s3 + $0x18] sm:$0xff]
  %v27 = vld [vmem:[%s0] sm:$0xff]
  %v28 = vld [vmem:[%s0 + $0x8] sm:$0xff]
  %v29 = vld [vmem:[%s0 + $0x10] sm:$0xff]
  %v30 = vld [vmem:[%s0 + $0x18] sm:$0xff]
  %v31 = vld [vmem:[%s0 + $0x20] sm:$0xff]
  %v32 = vld [vmem:[%s0 + $0x28] sm:$0xff]
  %v33 = vld [vmem:[%s0 + $0x30] sm:$0xff]
  %v34 = vld [vmem:[%s0 + $0x38] sm:$0xff]
  %v35 = vld [vmem:[%s1] sm:$0xff]
  %v36 = vld [vmem:[%s1 + $0x8] sm:$0xff]
  %v37 = vld [vmem:[%s1 + $0x10] sm:$0xff]
  %v38 = vld [vmem:[%s1 + $0x18] sm:$0xff]
  %v39 = vld [vmem:[%s1 + $0x20] sm:$0xff]
  %v40 = vld [vmem:[%s1 + $0x28] sm:$0xff]
  %v41 = vld [vmem:[%s1 + $0x30] sm:$0xff]
  %v42 = vld [vmem:[%s1 + $0x38] sm:$0xff]
  %vm43 = vcmask 261120
  %v45 = vsel %vm43, 0.0, 0
  %47 = vmatprep.subr.mxu0 0.0
  %48 = vmatpush1.msra.mxu0 %v23
  %49 = vmatprep.subr.mxu0 0.0
  %50 = vmatpush1.msra.mxu0 %v24
  %51 = vmatprep.subr.mxu0 0.0
  %52 = vmatpush1.msra.mxu0 %v25
  %53 = vmatprep.subr.mxu0 0.0
  %54 = vmatpush1.msra.mxu0 %v26
  %55 = vmatprep.subr.mxu0 0.0
  %56 = vmatpush1.msra.mxu0 0.0
  %57 = vmatprep.subr.mxu0 0.0
  %58 = vmatpush1.msra.mxu0 0.0
  %59 = vmatprep.subr.mxu0 0.0
  %60 = vmatpush1.msra.mxu0 0.0
  %61 = vmatprep.subr.mxu0 0.0
  %62 = vmatpush1.msra.mxu0 0.0
  %63 = vmatprep.subr.mxu0 0.0
  %64 = vmatpush1.msra.mxu0 0.0
  %65 = vmatprep.subr.mxu0 0.0
  %66 = vmatpush1.msra.mxu0 0.0
  %67 = vmatprep.subr.mxu0 0.0
  %68 = vmatpush1.msra.mxu0 0.0
  %69 = vmatprep.subr.mxu0 0.0
  %70 = vmatpush1.msra.mxu0 0.0
  %71 = vmatprep.subr.mxu0 0.0
  %72 = vmatpush1.msra.mxu0 0.0
  %73 = vmatprep.subr.mxu0 0.0
  %74 = vmatpush1.msra.mxu0 0.0
  %75 = vmatprep.subr.mxu0 0.0
  %76 = vmatpush1.msra.mxu0 0.0
  %77 = vmatprep.subr.mxu0 0.0
  %78 = vmatpush1.msra.mxu0 0.0
  %79 = vmatprep.subr.mxu0 0.0
  %80 = vmatpush1.msra.mxu0 0.0
  %81 = vmatprep.subr.mxu0 0.0
  %82 = vmatpush1.msra.mxu0 0.0
  %83 = vmatprep.subr.mxu0 0.0
  %84 = vmatpush1.msra.mxu0 0.0
  %85 = vmatprep.subr.mxu0 0.0
  %86 = vmatpush1.msra.mxu0 0.0
  %87 = vmatprep.subr.mxu0 0.0
  %88 = vmatpush1.msra.mxu0 0.0
  %89 = vmatprep.subr.mxu0 0.0
  %90 = vmatpush1.msra.mxu0 0.0
  %91 = vmatprep.subr.mxu0 0.0
  %92 = vmatpush1.msra.mxu0 0.0
  %93 = vmatprep.subr.mxu0 0.0
  %94 = vmatpush1.msra.mxu0 0.0
  %95 = vmatprep.subr.mxu0 0.0
  %96 = vmatpush1.msra.mxu0 0.0
  %97 = vmatprep.subr.mxu0 0.0
  %98 = vmatpush1.msra.mxu0 0.0
  %99 = vmatprep.subr.mxu0 0.0
  %100 = vmatpush1.msra.mxu0 0.0
  %101 = vmatprep.subr.mxu0 0.0
  %102 = vmatpush1.msra.mxu0 0.0
  %103 = vmatprep.subr.mxu0 0.0
  %104 = vmatpush1.msra.mxu0 0.0
  %105 = vmatprep.subr.mxu0 0.0
  %106 = vmatpush1.msra.mxu0 0.0
  %107 = vmatprep.subr.mxu0 0.0
  %108 = vmatpush1.msra.mxu0 0.0
  %109 = vmatprep.subr.mxu0 0.0
  %110 = vmatpush1.msra.mxu0 0.0
  %111 = vmatprep.mubr.f32.mxu0 0.0
  %112 = vmatmul.mubr.f32.gmra.mrb[0].mxu0 %v45
  %v113 = vpop.f32.mrb[0].mxu0
  %v114 = vadd.f32 0.0, %v113
  %v115 = vpop.f32.mrb[0].mxu0
  %116 = vdwg.mxu0
  %v117 = vadd.f32 %v27, %v114
  %v118 = vxor.u32 %v117, 2147483648
  %v119 = vmul.f32 %v118, 1.442695
  %v120 = vpow.pop %v119
  %v121 = vadd.f32 %v120, 1.0
  %v122 = vrcp.pop %v121
  %v123 = vmul.f32 1.0, %v122
  %v124 = vmul.f32 %v123, 2.0
  %v125 = vsub.f32 %v124, 1.0
  %v126 = vmul.f32 %v123, 0.0
  %128 = vrot.lane.b32.xlu0 %v125, 64
  %v129 = vpop.permute.xlu0 %128
  %v131 = vmul.f32 %v123, %v129
  %133 = vrot.lane.b32.xlu0 %v131, 32
  %v134 = vpop.permute.xlu0 %133
  %v136 = vadd.f32 %v126, %v134
  %v137 = vtanh.pop %v136
  %139 = vrot.lane.b32.xlu0 %v137, 64
  %v140 = vpop.permute.xlu0 %139
  %v142 = vmul.f32 %v123, %v140
  %144 = vrot.lane.b32.xlu0 %v35, 96
  %v145 = vpop.permute.xlu0 %144
  %v147 = vmul.f32 %v142, %v145
  %v148 = vadd.f32 %v147, 0.0
  %150 = vrot.lane.b32.xlu0 %v142, 32
  %v151 = vpop.permute.xlu0 %150
  %v152 = vsel %vm43, %v151, 0
  %154 = vmatprep.subr.mxu0 0.0
  %155 = vmatpush1.msra.mxu0 %v23
  %156 = vmatprep.subr.mxu0 0.0
  %157 = vmatpush1.msra.mxu0 %v24
  %158 = vmatprep.subr.mxu0 0.0
  %159 = vmatpush1.msra.mxu0 %v25
  %160 = vmatprep.subr.mxu0 0.0
  %161 = vmatpush1.msra.mxu0 %v26
  %162 = vmatprep.subr.mxu0 0.0
  %163 = vmatpush1.msra.mxu0 0.0
  %164 = vmatprep.subr.mxu0 0.0
  %165 = vmatpush1.msra.mxu0 0.0
  %166 = vmatprep.subr.mxu0 0.0
  %167 = vmatpush1.msra.mxu0 0.0
  %168 = vmatprep.subr.mxu0 0.0
  %169 = vmatpush1.msra.mxu0 0.0
  %170 = vmatprep.subr.mxu0 0.0
  %171 = vmatpush1.msra.mxu0 0.0
  %172 = vmatprep.subr.mxu0 0.0
  %173 = vmatpush1.msra.mxu0 0.0
  %174 = vmatprep.subr.mxu0 0.0
  %175 = vmatpush1.msra.mxu0 0.0
  %176 = vmatprep.subr.mxu0 0.0
  %177 = vmatpush1.msra.mxu0 0.0
  %178 = vmatprep.subr.mxu0 0.0
  %179 = vmatpush1.msra.mxu0 0.0
  %180 = vmatprep.subr.mxu0 0.0
  %181 = vmatpush1.msra.mxu0 0.0
  %182 = vmatprep.subr.mxu0 0.0
  %183 = vmatpush1.msra.mxu0 0.0
  %184 = vmatprep.subr.mxu0 0.0
  %185 = vmatpush1.msra.mxu0 0.0
  %186 = vmatprep.subr.mxu0 0.0
  %187 = vmatpush1.msra.mxu0 0.0
  %188 = vmatprep.subr.mxu0 0.0
  %189 = vmatpush1.msra.mxu0 0.0
  %190 = vmatprep.subr.mxu0 0.0
  %191 = vmatpush1.msra.mxu0 0.0
  %192 = vmatprep.subr.mxu0 0.0
  %193 = vmatpush1.msra.mxu0 0.0
  %194 = vmatprep.subr.mxu0 0.0
  %195 = vmatpush1.msra.mxu0 0.0
  %196 = vmatprep.subr.mxu0 0.0
  %197 = vmatpush1.msra.mxu0 0.0
  %198 = vmatprep.subr.mxu0 0.0
  %199 = vmatpush1.msra.mxu0 0.0
  %200 = vmatprep.subr.mxu0 0.0
  %201 = vmatpush1.msra.mxu0 0.0
  %202 = vmatprep.subr.mxu0 0.0
  %203 = vmatpush1.msra.mxu0 0.0
  %204 = vmatprep.subr.mxu0 0.0
  %205 = vmatpush1.msra.mxu0 0.0
  %206 = vmatprep.subr.mxu0 0.0
  %207 = vmatpush1.msra.mxu0 0.0
  %208 = vmatprep.subr.mxu0 0.0
  %209 = vmatpush1.msra.mxu0 0.0
  %210 = vmatprep.subr.mxu0 0.0
  %211 = vmatpush1.msra.mxu0 0.0
  %212 = vmatprep.subr.mxu0 0.0
  %213 = vmatpush1.msra.mxu0 0.0
  %214 = vmatprep.subr.mxu0 0.0
  %215 = vmatpush1.msra.mxu0 0.0
  %216 = vmatprep.subr.mxu0 0.0
  %217 = vmatpush1.msra.mxu0 0.0
  %218 = vmatprep.mubr.f32.mxu0 0.0
  %219 = vmatmul.mubr.f32.gmra.mrb[0].mxu0 %v152
  %v220 = vpop.f32.mrb[0].mxu0
  %v221 = vadd.f32 0.0, %v220
  %v222 = vpop.f32.mrb[0].mxu0
  %223 = vdwg.mxu0
  %v224 = vadd.f32 %v28, %v221
  %v225 = vxor.u32 %v224, 2147483648
  %v226 = vmul.f32 %v225, 1.442695
  %v227 = vpow.pop %v226
  %v228 = vadd.f32 %v227, 1.0
  %v229 = vrcp.pop %v228
  %v230 = vmul.f32 1.0, %v229
  %v231 = vmul.f32 %v230, 2.0
  %v232 = vsub.f32 %v231, 1.0
  %v233 = vmul.f32 %v230, %v136
  %235 = vrot.lane.b32.xlu0 %v232, 64
  %v236 = vpop.permute.xlu0 %235
  %v238 = vmul.f32 %v230, %v236
  %240 = vrot.lane.b32.xlu0 %v238, 32
  %v241 = vpop.permute.xlu0 %240
  %v243 = vadd.f32 %v233, %v241
  %v244 = vtanh.pop %v243
  %246 = vrot.lane.b32.xlu0 %v244, 64
  %v247 = vpop.permute.xlu0 %246
  %v249 = vmul.f32 %v230, %v247
  %251 = vrot.lane.b32.xlu0 %v36, 96
  %v252 = vpop.permute.xlu0 %251
  %v254 = vmul.f32 %v249, %v252
  %v255 = vadd.f32 %v148, %v254
  %257 = vrot.lane.b32.xlu0 %v249, 32
  %v258 = vpop.permute.xlu0 %257
  %v259 = vsel %vm43, %v258, 0
  %261 = vmatprep.subr.mxu0 0.0
  %262 = vmatpush1.msra.mxu0 %v23
  %263 = vmatprep.subr.mxu0 0.0
  %264 = vmatpush1.msra.mxu0 %v24
  %265 = vmatprep.subr.mxu0 0.0
  %266 = vmatpush1.msra.mxu0 %v25
  %267 = vmatprep.subr.mxu0 0.0
  %268 = vmatpush1.msra.mxu0 %v26
  %269 = vmatprep.subr.mxu0 0.0
  %270 = vmatpush1.msra.mxu0 0.0
  %271 = vmatprep.subr.mxu0 0.0
  %272 = vmatpush1.msra.mxu0 0.0
  %273 = vmatprep.subr.mxu0 0.0
  %274 = vmatpush1.msra.mxu0 0.0
  %275 = vmatprep.subr.mxu0 0.0
  %276 = vmatpush1.msra.mxu0 0.0
  %277 = vmatprep.subr.mxu0 0.0
  %278 = vmatpush1.msra.mxu0 0.0
  %279 = vmatprep.subr.mxu0 0.0
  %280 = vmatpush1.msra.mxu0 0.0
  %281 = vmatprep.subr.mxu0 0.0
  %282 = vmatpush1.msra.mxu0 0.0
  %283 = vmatprep.subr.mxu0 0.0
  %284 = vmatpush1.msra.mxu0 0.0
  %285 = vmatprep.subr.mxu0 0.0
  %286 = vmatpush1.msra.mxu0 0.0
  %287 = vmatprep.subr.mxu0 0.0
  %288 = vmatpush1.msra.mxu0 0.0
  %289 = vmatprep.subr.mxu0 0.0
  %290 = vmatpush1.msra.mxu0 0.0
  %291 = vmatprep.subr.mxu0 0.0
  %292 = vmatpush1.msra.mxu0 0.0
  %293 = vmatprep.subr.mxu0 0.0
  %294 = vmatpush1.msra.mxu0 0.0
  %295 = vmatprep.subr.mxu0 0.0
  %296 = vmatpush1.msra.mxu0 0.0
  %297 = vmatprep.subr.mxu0 0.0
  %298 = vmatpush1.msra.mxu0 0.0
  %299 = vmatprep.subr.mxu0 0.0
  %300 = vmatpush1.msra.mxu0 0.0
  %301 = vmatprep.subr.mxu0 0.0
  %302 = vmatpush1.msra.mxu0 0.0
  %303 = vmatprep.subr.mxu0 0.0
  %304 = vmatpush1.msra.mxu0 0.0
  %305 = vmatprep.subr.mxu0 0.0
  %306 = vmatpush1.msra.mxu0 0.0
  %307 = vmatprep.subr.mxu0 0.0
  %308 = vmatpush1.msra.mxu0 0.0
  %309 = vmatprep.subr.mxu0 0.0
  %310 = vmatpush1.msra.mxu0 0.0
  %311 = vmatprep.subr.mxu0 0.0
  %312 = vmatpush1.msra.mxu0 0.0
  %313 = vmatprep.subr.mxu0 0.0
  %314 = vmatpush1.msra.mxu0 0.0
  %315 = vmatprep.subr.mxu0 0.0
  %316 = vmatpush1.msra.mxu0 0.0
  %317 = vmatprep.subr.mxu0 0.0
  %318 = vmatpush1.msra.mxu0 0.0
  %319 = vmatprep.subr.mxu0 0.0
  %320 = vmatpush1.msra.mxu0 0.0
  %321 = vmatprep.subr.mxu0 0.0
  %322 = vmatpush1.msra.mxu0 0.0
  %323 = vmatprep.subr.mxu0 0.0
  %324 = vmatpush1.msra.mxu0 0.0
  %325 = vmatprep.mubr.f32.mxu0 0.0
  %326 = vmatmul.mubr.f32.gmra.mrb[0].mxu0 %v259
  %v327 = vpop.f32.mrb[0].mxu0
  %v328 = vadd.f32 0.0, %v327
  %v329 = vpop.f32.mrb[0].mxu0
  %330 = vdwg.mxu0
  %v331 = vadd.f32 %v29, %v328
  %v332 = vxor.u32 %v331, 2147483648
  %v333 = vmul.f32 %v332, 1.442695
  %v334 = vpow.pop %v333
  %v335 = vadd.f32 %v334, 1.0
  %v336 = vrcp.pop %v335
  %v337 = vmul.f32 1.0, %v336
  %v338 = vmul.f32 %v337, 2.0
  %v339 = vsub.f32 %v338, 1.0
  %v340 = vmul.f32 %v337, %v243
  %342 = vrot.lane.b32.xlu0 %v339, 64
  %v343 = vpop.permute.xlu0 %342
  %v345 = vmul.f32 %v337, %v343
  %347 = vrot.lane.b32.xlu0 %v345, 32
  %v348 = vpop.permute.xlu0 %347
  %v350 = vadd.f32 %v340, %v348
  %v351 = vtanh.pop %v350
  %353 = vrot.lane.b32.xlu0 %v351, 64
  %v354 = vpop.permute.xlu0 %353
  %v356 = vmul.f32 %v337, %v354
  %358 = vrot.lane.b32.xlu0 %v37, 96
  %v359 = vpop.permute.xlu0 %358
  %v361 = vmul.f32 %v356, %v359
  %v362 = vadd.f32 %v255, %v361
  %364 = vrot.lane.b32.xlu0 %v356, 32
  %v365 = vpop.permute.xlu0 %364
  %v366 = vsel %vm43, %v365, 0
  %368 = vmatprep.subr.mxu0 0.0
  %369 = vmatpush1.msra.mxu0 %v23
  %370 = vmatprep.subr.mxu0 0.0
  %371 = vmatpush1.msra.mxu0 %v24
  %372 = vmatprep.subr.mxu0 0.0
  %373 = vmatpush1.msra.mxu0 %v25
  %374 = vmatprep.subr.mxu0 0.0
  %375 = vmatpush1.msra.mxu0 %v26
  %376 = vmatprep.subr.mxu0 0.0
  %377 = vmatpush1.msra.mxu0 0.0
  %378 = vmatprep.subr.mxu0 0.0
  %379 = vmatpush1.msra.mxu0 0.0
  %380 = vmatprep.subr.mxu0 0.0
  %381 = vmatpush1.msra.mxu0 0.0
  %382 = vmatprep.subr.mxu0 0.0
  %383 = vmatpush1.msra.mxu0 0.0
  %384 = vmatprep.subr.mxu0 0.0
  %385 = vmatpush1.msra.mxu0 0.0
  %386 = vmatprep.subr.mxu0 0.0
  %387 = vmatpush1.msra.mxu0 0.0
  %388 = vmatprep.subr.mxu0 0.0
  %389 = vmatpush1.msra.mxu0 0.0
  %390 = vmatprep.subr.mxu0 0.0
  %391 = vmatpush1.msra.mxu0 0.0
  %392 = vmatprep.subr.mxu0 0.0
  %393 = vmatpush1.msra.mxu0 0.0
  %394 = vmatprep.subr.mxu0 0.0
  %395 = vmatpush1.msra.mxu0 0.0
  %396 = vmatprep.subr.mxu0 0.0
  %397 = vmatpush1.msra.mxu0 0.0
  %398 = vmatprep.subr.mxu0 0.0
  %399 = vmatpush1.msra.mxu0 0.0
  %400 = vmatprep.subr.mxu0 0.0
  %401 = vmatpush1.msra.mxu0 0.0
  %402 = vmatprep.subr.mxu0 0.0
  %403 = vmatpush1.msra.mxu0 0.0
  %404 = vmatprep.subr.mxu0 0.0
  %405 = vmatpush1.msra.mxu0 0.0
  %406 = vmatprep.subr.mxu0 0.0
  %407 = vmatpush1.msra.mxu0 0.0
  %408 = vmatprep.subr.mxu0 0.0
  %409 = vmatpush1.msra.mxu0 0.0
  %410 = vmatprep.subr.mxu0 0.0
  %411 = vmatpush1.msra.mxu0 0.0
  %412 = vmatprep.subr.mxu0 0.0
  %413 = vmatpush1.msra.mxu0 0.0
  %414 = vmatprep.subr.mxu0 0.0
  %415 = vmatpush1.msra.mxu0 0.0
  %416 = vmatprep.subr.mxu0 0.0
  %417 = vmatpush1.msra.mxu0 0.0
  %418 = vmatprep.subr.mxu0 0.0
  %419 = vmatpush1.msra.mxu0 0.0
  %420 = vmatprep.subr.mxu0 0.0
  %421 = vmatpush1.msra.mxu0 0.0
  %422 = vmatprep.subr.mxu0 0.0
  %423 = vmatpush1.msra.mxu0 0.0
  %424 = vmatprep.subr.mxu0 0.0
  %425 = vmatpush1.msra.mxu0 0.0
  %426 = vmatprep.subr.mxu0 0.0
  %427 = vmatpush1.msra.mxu0 0.0
  %428 = vmatprep.subr.mxu0 0.0
  %429 = vmatpush1.msra.mxu0 0.0
  %430 = vmatprep.subr.mxu0 0.0
  %431 = vmatpush1.msra.mxu0 0.0
  %432 = vmatprep.mubr.f32.mxu0 0.0
  %433 = vmatmul.mubr.f32.gmra.mrb[0].mxu0 %v366
  %v434 = vpop.f32.mrb[0].mxu0
  %v435 = vadd.f32 0.0, %v434
  %v436 = vpop.f32.mrb[0].mxu0
  %437 = vdwg.mxu0
  %v438 = vadd.f32 %v30, %v435
  %v439 = vxor.u32 %v438, 2147483648
  %v440 = vmul.f32 %v439, 1.442695
  %v441 = vpow.pop %v440
  %v442 = vadd.f32 %v441, 1.0
  %v443 = vrcp.pop %v442
  %v444 = vmul.f32 1.0, %v443
  %v445 = vmul.f32 %v444, 2.0
  %v446 = vsub.f32 %v445, 1.0
  %v447 = vmul.f32 %v444, %v350
  %449 = vrot.lane.b32.xlu0 %v446, 64
  %v450 = vpop.permute.xlu0 %449
  %v452 = vmul.f32 %v444, %v450
  %454 = vrot.lane.b32.xlu0 %v452, 32
  %v455 = vpop.permute.xlu0 %454
  %v457 = vadd.f32 %v447, %v455
  %v458 = vtanh.pop %v457
  %460 = vrot.lane.b32.xlu0 %v458, 64
  %v461 = vpop.permute.xlu0 %460
  %v463 = vmul.f32 %v444, %v461
  %465 = vrot.lane.b32.xlu0 %v38, 96
  %v466 = vpop.permute.xlu0 %465
  %v468 = vmul.f32 %v463, %v466
  %v469 = vadd.f32 %v362, %v468
  %471 = vrot.lane.b32.xlu0 %v463, 32
  %v472 = vpop.permute.xlu0 %471
  %v473 = vsel %vm43, %v472, 0
  %475 = vmatprep.subr.mxu0 0.0
  %476 = vmatpush1.msra.mxu0 %v23
  %477 = vmatprep.subr.mxu0 0.0
  %478 = vmatpush1.msra.mxu0 %v24
  %479 = vmatprep.subr.mxu0 0.0
  %480 = vmatpush1.msra.mxu0 %v25
  %481 = vmatprep.subr.mxu0 0.0
  %482 = vmatpush1.msra.mxu0 %v26
  %483 = vmatprep.subr.mxu0 0.0
  %484 = vmatpush1.msra.mxu0 0.0
  %485 = vmatprep.subr.mxu0 0.0
  %486 = vmatpush1.msra.mxu0 0.0
  %487 = vmatprep.subr.mxu0 0.0
  %488 = vmatpush1.msra.mxu0 0.0
  %489 = vmatprep.subr.mxu0 0.0
  %490 = vmatpush1.msra.mxu0 0.0
  %491 = vmatprep.subr.mxu0 0.0
  %492 = vmatpush1.msra.mxu0 0.0
  %493 = vmatprep.subr.mxu0 0.0
  %494 = vmatpush1.msra.mxu0 0.0
  %495 = vmatprep.subr.mxu0 0.0
  %496 = vmatpush1.msra.mxu0 0.0
  %497 = vmatprep.subr.mxu0 0.0
  %498 = vmatpush1.msra.mxu0 0.0
  %499 = vmatprep.subr.mxu0 0.0
  %500 = vmatpush1.msra.mxu0 0.0
  %501 = vmatprep.subr.mxu0 0.0
  %502 = vmatpush1.msra.mxu0 0.0
  %503 = vmatprep.subr.mxu0 0.0
  %504 = vmatpush1.msra.mxu0 0.0
  %505 = vmatprep.subr.mxu0 0.0
  %506 = vmatpush1.msra.mxu0 0.0
  %507 = vmatprep.subr.mxu0 0.0
  %508 = vmatpush1.msra.mxu0 0.0
  %509 = vmatprep.subr.mxu0 0.0
  %510 = vmatpush1.msra.mxu0 0.0
  %511 = vmatprep.subr.mxu0 0.0
  %512 = vmatpush1.msra.mxu0 0.0
  %513 = vmatprep.subr.mxu0 0.0
  %514 = vmatpush1.msra.mxu0 0.0
  %515 = vmatprep.subr.mxu0 0.0
  %516 = vmatpush1.msra.mxu0 0.0
  %517 = vmatprep.subr.mxu0 0.0
  %518 = vmatpush1.msra.mxu0 0.0
  %519 = vmatprep.subr.mxu0 0.0
  %520 = vmatpush1.msra.mxu0 0.0
  %521 = vmatprep.subr.mxu0 0.0
  %522 = vmatpush1.msra.mxu0 0.0
  %523 = vmatprep.subr.mxu0 0.0
  %524 = vmatpush1.msra.mxu0 0.0
  %525 = vmatprep.subr.mxu0 0.0
  %526 = vmatpush1.msra.mxu0 0.0
  %527 = vmatprep.subr.mxu0 0.0
  %528 = vmatpush1.msra.mxu0 0.0
  %529 = vmatprep.subr.mxu0 0.0
  %530 = vmatpush1.msra.mxu0 0.0
  %531 = vmatprep.subr.mxu0 0.0
  %532 = vmatpush1.msra.mxu0 0.0
  %533 = vmatprep.subr.mxu0 0.0
  %534 = vmatpush1.msra.mxu0 0.0
  %535 = vmatprep.subr.mxu0 0.0
  %536 = vmatpush1.msra.mxu0 0.0
  %537 = vmatprep.subr.mxu0 0.0
  %538 = vmatpush1.msra.mxu0 0.0
  %539 = vmatprep.mubr.f32.mxu0 0.0
  %540 = vmatmul.mubr.f32.gmra.mrb[0].mxu0 %v473
  %v541 = vpop.f32.mrb[0].mxu0
  %v542 = vadd.f32 0.0, %v541
  %v543 = vpop.f32.mrb[0].mxu0
  %544 = vdwg.mxu0
  %v545 = vadd.f32 %v31, %v542
  %v546 = vxor.u32 %v545, 2147483648
  %v547 = vmul.f32 %v546, 1.442695
  %v548 = vpow.pop %v547
  %v549 = vadd.f32 %v548, 1.0
  %v550 = vrcp.pop %v549
  %v551 = vmul.f32 1.0, %v550
  %v552 = vmul.f32 %v551, 2.0
  %v553 = vsub.f32 %v552, 1.0
  %v554 = vmul.f32 %v551, %v457
  %556 = vrot.lane.b32.xlu0 %v553, 64
  %v557 = vpop.permute.xlu0 %556
  %v559 = vmul.f32 %v551, %v557
  %561 = vrot.lane.b32.xlu0 %v559, 32
  %v562 = vpop.permute.xlu0 %561
  %v564 = vadd.f32 %v554, %v562
  %v565 = vtanh.pop %v564
  %567 = vrot.lane.b32.xlu0 %v565, 64
  %v568 = vpop.permute.xlu0 %567
  %v570 = vmul.f32 %v551, %v568
  %572 = vrot.lane.b32.xlu0 %v39, 96
  %v573 = vpop.permute.xlu0 %572
  %v575 = vmul.f32 %v570, %v573
  %v576 = vadd.f32 %v469, %v575
  %578 = vrot.lane.b32.xlu0 %v570, 32
  %v579 = vpop.permute.xlu0 %578
  %v580 = vsel %vm43, %v579, 0
  %582 = vmatprep.subr.mxu0 0.0
  %583 = vmatpush1.msra.mxu0 %v23
  %584 = vmatprep.subr.mxu0 0.0
  %585 = vmatpush1.msra.mxu0 %v24
  %586 = vmatprep.subr.mxu0 0.0
  %587 = vmatpush1.msra.mxu0 %v25
  %588 = vmatprep.subr.mxu0 0.0
  %589 = vmatpush1.msra.mxu0 %v26
  %590 = vmatprep.subr.mxu0 0.0
  %591 = vmatpush1.msra.mxu0 0.0
  %592 = vmatprep.subr.mxu0 0.0
  %593 = vmatpush1.msra.mxu0 0.0
  %594 = vmatprep.subr.mxu0 0.0
  %595 = vmatpush1.msra.mxu0 0.0
  %596 = vmatprep.subr.mxu0 0.0
  %597 = vmatpush1.msra.mxu0 0.0
  %598 = vmatprep.subr.mxu0 0.0
  %599 = vmatpush1.msra.mxu0 0.0
  %600 = vmatprep.subr.mxu0 0.0
  %601 = vmatpush1.msra.mxu0 0.0
  %602 = vmatprep.subr.mxu0 0.0
  %603 = vmatpush1.msra.mxu0 0.0
  %604 = vmatprep.subr.mxu0 0.0
  %605 = vmatpush1.msra.mxu0 0.0
  %606 = vmatprep.subr.mxu0 0.0
  %607 = vmatpush1.msra.mxu0 0.0
  %608 = vmatprep.subr.mxu0 0.0
  %609 = vmatpush1.msra.mxu0 0.0
  %610 = vmatprep.subr.mxu0 0.0
  %611 = vmatpush1.msra.mxu0 0.0
  %612 = vmatprep.subr.mxu0 0.0
  %613 = vmatpush1.msra.mxu0 0.0
  %614 = vmatprep.subr.mxu0 0.0
  %615 = vmatpush1.msra.mxu0 0.0
  %616 = vmatprep.subr.mxu0 0.0
  %617 = vmatpush1.msra.mxu0 0.0
  %618 = vmatprep.subr.mxu0 0.0
  %619 = vmatpush1.msra.mxu0 0.0
  %620 = vmatprep.subr.mxu0 0.0
  %621 = vmatpush1.msra.mxu0 0.0
  %622 = vmatprep.subr.mxu0 0.0
  %623 = vmatpush1.msra.mxu0 0.0
  %624 = vmatprep.subr.mxu0 0.0
  %625 = vmatpush1.msra.mxu0 0.0
  %626 = vmatprep.subr.mxu0 0.0
  %627 = vmatpush1.msra.mxu0 0.0
  %628 = vmatprep.subr.mxu0 0.0
  %629 = vmatpush1.msra.mxu0 0.0
  %630 = vmatprep.subr.mxu0 0.0
  %631 = vmatpush1.msra.mxu0 0.0
  %632 = vmatprep.subr.mxu0 0.0
  %633 = vmatpush1.msra.mxu0 0.0
  %634 = vmatprep.subr.mxu0 0.0
  %635 = vmatpush1.msra.mxu0 0.0
  %636 = vmatprep.subr.mxu0 0.0
  %637 = vmatpush1.msra.mxu0 0.0
  %638 = vmatprep.subr.mxu0 0.0
  %639 = vmatpush1.msra.mxu0 0.0
  %640 = vmatprep.subr.mxu0 0.0
  %641 = vmatpush1.msra.mxu0 0.0
  %642 = vmatprep.subr.mxu0 0.0
  %643 = vmatpush1.msra.mxu0 0.0
  %644 = vmatprep.subr.mxu0 0.0
  %645 = vmatpush1.msra.mxu0 0.0
  %646 = vmatprep.mubr.f32.mxu0 0.0
  %647 = vmatmul.mubr.f32.gmra.mrb[0].mxu0 %v580
  %v648 = vpop.f32.mrb[0].mxu0
  %v649 = vadd.f32 0.0, %v648
  %v650 = vpop.f32.mrb[0].mxu0
  %651 = vdwg.mxu0
  %v652 = vadd.f32 %v32, %v649
  %v653 = vxor.u32 %v652, 2147483648
  %v654 = vmul.f32 %v653, 1.442695
  %v655 = vpow.pop %v654
  %v656 = vadd.f32 %v655, 1.0
  %v657 = vrcp.pop %v656
  %v658 = vmul.f32 1.0, %v657
  %v659 = vmul.f32 %v658, 2.0
  %v660 = vsub.f32 %v659, 1.0
  %v661 = vmul.f32 %v658, %v564
  %663 = vrot.lane.b32.xlu0 %v660, 64
  %v664 = vpop.permute.xlu0 %663
  %v666 = vmul.f32 %v658, %v664
  %668 = vrot.lane.b32.xlu0 %v666, 32
  %v669 = vpop.permute.xlu0 %668
  %v671 = vadd.f32 %v661, %v669
  %v672 = vtanh.pop %v671
  %674 = vrot.lane.b32.xlu0 %v672, 64
  %v675 = vpop.permute.xlu0 %674
  %v677 = vmul.f32 %v658, %v675
  %679 = vrot.lane.b32.xlu0 %v40, 96
  %v680 = vpop.permute.xlu0 %679
  %v682 = vmul.f32 %v677, %v680
  %v683 = vadd.f32 %v576, %v682
  %685 = vrot.lane.b32.xlu0 %v677, 32
  %v686 = vpop.permute.xlu0 %685
  %v687 = vsel %vm43, %v686, 0
  %689 = vmatprep.subr.mxu0 0.0
  %690 = vmatpush1.msra.mxu0 %v23
  %691 = vmatprep.subr.mxu0 0.0
  %692 = vmatpush1.msra.mxu0 %v24
  %693 = vmatprep.subr.mxu0 0.0
  %694 = vmatpush1.msra.mxu0 %v25
  %695 = vmatprep.subr.mxu0 0.0
  %696 = vmatpush1.msra.mxu0 %v26
  %697 = vmatprep.subr.mxu0 0.0
  %698 = vmatpush1.msra.mxu0 0.0
  %699 = vmatprep.subr.mxu0 0.0
  %700 = vmatpush1.msra.mxu0 0.0
  %701 = vmatprep.subr.mxu0 0.0
  %702 = vmatpush1.msra.mxu0 0.0
  %703 = vmatprep.subr.mxu0 0.0
  %704 = vmatpush1.msra.mxu0 0.0
  %705 = vmatprep.subr.mxu0 0.0
  %706 = vmatpush1.msra.mxu0 0.0
  %707 = vmatprep.subr.mxu0 0.0
  %708 = vmatpush1.msra.mxu0 0.0
  %709 = vmatprep.subr.mxu0 0.0
  %710 = vmatpush1.msra.mxu0 0.0
  %711 = vmatprep.subr.mxu0 0.0
  %712 = vmatpush1.msra.mxu0 0.0
  %713 = vmatprep.subr.mxu0 0.0
  %714 = vmatpush1.msra.mxu0 0.0
  %715 = vmatprep.subr.mxu0 0.0
  %716 = vmatpush1.msra.mxu0 0.0
  %717 = vmatprep.subr.mxu0 0.0
  %718 = vmatpush1.msra.mxu0 0.0
  %719 = vmatprep.subr.mxu0 0.0
  %720 = vmatpush1.msra.mxu0 0.0
  %721 = vmatprep.subr.mxu0 0.0
  %722 = vmatpush1.msra.mxu0 0.0
  %723 = vmatprep.subr.mxu0 0.0
  %724 = vmatpush1.msra.mxu0 0.0
  %725 = vmatprep.subr.mxu0 0.0
  %726 = vmatpush1.msra.mxu0 0.0
  %727 = vmatprep.subr.mxu0 0.0
  %728 = vmatpush1.msra.mxu0 0.0
  %729 = vmatprep.subr.mxu0 0.0
  %730 = vmatpush1.msra.mxu0 0.0
  %731 = vmatprep.subr.mxu0 0.0
  %732 = vmatpush1.msra.mxu0 0.0
  %733 = vmatprep.subr.mxu0 0.0
  %734 = vmatpush1.msra.mxu0 0.0
  %735 = vmatprep.subr.mxu0 0.0
  %736 = vmatpush1.msra.mxu0 0.0
  %737 = vmatprep.subr.mxu0 0.0
  %738 = vmatpush1.msra.mxu0 0.0
  %739 = vmatprep.subr.mxu0 0.0
  %740 = vmatpush1.msra.mxu0 0.0
  %741 = vmatprep.subr.mxu0 0.0
  %742 = vmatpush1.msra.mxu0 0.0
  %743 = vmatprep.subr.mxu0 0.0
  %744 = vmatpush1.msra.mxu0 0.0
  %745 = vmatprep.subr.mxu0 0.0
  %746 = vmatpush1.msra.mxu0 0.0
  %747 = vmatprep.subr.mxu0 0.0
  %748 = vmatpush1.msra.mxu0 0.0
  %749 = vmatprep.subr.mxu0 0.0
  %750 = vmatpush1.msra.mxu0 0.0
  %751 = vmatprep.subr.mxu0 0.0
  %752 = vmatpush1.msra.mxu0 0.0
  %753 = vmatprep.mubr.f32.mxu0 0.0
  %754 = vmatmul.mubr.f32.gmra.mrb[0].mxu0 %v687
  %v755 = vpop.f32.mrb[0].mxu0
  %v756 = vadd.f32 0.0, %v755
  %v757 = vpop.f32.mrb[0].mxu0
  %758 = vdwg.mxu0
  %v759 = vadd.f32 %v33, %v756
  %v760 = vxor.u32 %v759, 2147483648
  %v761 = vmul.f32 %v760, 1.442695
  %v762 = vpow.pop %v761
  %v763 = vadd.f32 %v762, 1.0
  %v764 = vrcp.pop %v763
  %v765 = vmul.f32 1.0, %v764
  %v766 = vmul.f32 %v765, 2.0
  %v767 = vsub.f32 %v766, 1.0
  %v768 = vmul.f32 %v765, %v671
  %770 = vrot.lane.b32.xlu0 %v767, 64
  %v771 = vpop.permute.xlu0 %770
  %v773 = vmul.f32 %v765, %v771
  %775 = vrot.lane.b32.xlu0 %v773, 32
  %v776 = vpop.permute.xlu0 %775
  %v778 = vadd.f32 %v768, %v776
  %v779 = vtanh.pop %v778
  %781 = vrot.lane.b32.xlu0 %v779, 64
  %v782 = vpop.permute.xlu0 %781
  %v784 = vmul.f32 %v765, %v782
  %786 = vrot.lane.b32.xlu0 %v41, 96
  %v787 = vpop.permute.xlu0 %786
  %v789 = vmul.f32 %v784, %v787
  %v790 = vadd.f32 %v683, %v789
  %792 = vrot.lane.b32.xlu0 %v784, 32
  %v793 = vpop.permute.xlu0 %792
  %v794 = vsel %vm43, %v793, 0
  %796 = vmatprep.subr.mxu0 0.0
  %797 = vmatpush1.msra.mxu0 %v23
  %798 = vmatprep.subr.mxu0 0.0
  %799 = vmatpush1.msra.mxu0 %v24
  %800 = vmatprep.subr.mxu0 0.0
  %801 = vmatpush1.msra.mxu0 %v25
  %802 = vmatprep.subr.mxu0 0.0
  %803 = vmatpush1.msra.mxu0 %v26
  %804 = vmatprep.subr.mxu0 0.0
  %805 = vmatpush1.msra.mxu0 0.0
  %806 = vmatprep.subr.mxu0 0.0
  %807 = vmatpush1.msra.mxu0 0.0
  %808 = vmatprep.subr.mxu0 0.0
  %809 = vmatpush1.msra.mxu0 0.0
  %810 = vmatprep.subr.mxu0 0.0
  %811 = vmatpush1.msra.mxu0 0.0
  %812 = vmatprep.subr.mxu0 0.0
  %813 = vmatpush1.msra.mxu0 0.0
  %814 = vmatprep.subr.mxu0 0.0
  %815 = vmatpush1.msra.mxu0 0.0
  %816 = vmatprep.subr.mxu0 0.0
  %817 = vmatpush1.msra.mxu0 0.0
  %818 = vmatprep.subr.mxu0 0.0
  %819 = vmatpush1.msra.mxu0 0.0
  %820 = vmatprep.subr.mxu0 0.0
  %821 = vmatpush1.msra.mxu0 0.0
  %822 = vmatprep.subr.mxu0 0.0
  %823 = vmatpush1.msra.mxu0 0.0
  %824 = vmatprep.subr.mxu0 0.0
  %825 = vmatpush1.msra.mxu0 0.0
  %826 = vmatprep.subr.mxu0 0.0
  %827 = vmatpush1.msra.mxu0 0.0
  %828 = vmatprep.subr.mxu0 0.0
  %829 = vmatpush1.msra.mxu0 0.0
  %830 = vmatprep.subr.mxu0 0.0
  %831 = vmatpush1.msra.mxu0 0.0
  %832 = vmatprep.subr.mxu0 0.0
  %833 = vmatpush1.msra.mxu0 0.0
  %834 = vmatprep.subr.mxu0 0.0
  %835 = vmatpush1.msra.mxu0 0.0
  %836 = vmatprep.subr.mxu0 0.0
  %837 = vmatpush1.msra.mxu0 0.0
  %838 = vmatprep.subr.mxu0 0.0
  %839 = vmatpush1.msra.mxu0 0.0
  %840 = vmatprep.subr.mxu0 0.0
  %841 = vmatpush1.msra.mxu0 0.0
  %842 = vmatprep.subr.mxu0 0.0
  %843 = vmatpush1.msra.mxu0 0.0
  %844 = vmatprep.subr.mxu0 0.0
  %845 = vmatpush1.msra.mxu0 0.0
  %846 = vmatprep.subr.mxu0 0.0
  %847 = vmatpush1.msra.mxu0 0.0
  %848 = vmatprep.subr.mxu0 0.0
  %849 = vmatpush1.msra.mxu0 0.0
  %850 = vmatprep.subr.mxu0 0.0
  %851 = vmatpush1.msra.mxu0 0.0
  %852 = vmatprep.subr.mxu0 0.0
  %853 = vmatpush1.msra.mxu0 0.0
  %854 = vmatprep.subr.mxu0 0.0
  %855 = vmatpush1.msra.mxu0 0.0
  %856 = vmatprep.subr.mxu0 0.0
  %857 = vmatpush1.msra.mxu0 0.0
  %858 = vmatprep.subr.mxu0 0.0
  %859 = vmatpush1.msra.mxu0 0.0
  %860 = vmatprep.mubr.f32.mxu0 0.0
  %861 = vmatmul.mubr.f32.gmra.mrb[0].mxu0 %v794
  %v862 = vpop.f32.mrb[0].mxu0
  %v863 = vadd.f32 0.0, %v862
  %v864 = vpop.f32.mrb[0].mxu0
  %865 = vdwg.mxu0
  %v866 = vadd.f32 %v34, %v863
  %v867 = vxor.u32 %v866, 2147483648
  %v868 = vmul.f32 %v867, 1.442695
  %v869 = vpow.pop %v868
  %v870 = vadd.f32 %v869, 1.0
  %v871 = vrcp.pop %v870
  %v872 = vmul.f32 1.0, %v871
  %v873 = vmul.f32 %v872, 2.0
  %v874 = vsub.f32 %v873, 1.0
  %v875 = vmul.f32 %v872, %v778
  %877 = vrot.lane.b32.xlu0 %v874, 64
  %v878 = vpop.permute.xlu0 %877
  %v880 = vmul.f32 %v872, %v878
  %882 = vrot.lane.b32.xlu0 %v880, 32
  %v883 = vpop.permute.xlu0 %882
  %v885 = vadd.f32 %v875, %v883
  %v886 = vtanh.pop %v885
  %888 = vrot.lane.b32.xlu0 %v886, 64
  %v889 = vpop.permute.xlu0 %888
  %v891 = vmul.f32 %v872, %v889
  %893 = vrot.lane.b32.xlu0 %v42, 96
  %v894 = vpop.permute.xlu0 %893
  %v896 = vmul.f32 %v891, %v894
  %v897 = vadd.f32 %v790, %v896
  %v898 = vld [vmem:[%s2] sm:$0xff]
  %900 = vset.pattern.permute.xlu0 0
  %901 = vperm.xlu0 %900, %v898
  %v902 = vpop.permute.xlu0 %901
  %v904 = vmul.f32 %v897, %v902
  %v905 = vld [vmem:[%s4] sm:$0xff]
  %v906 = vld [vmem:[%s4 + $0x8] sm:$0xff]
  %v907 = vld [vmem:[%s4 + $0x10] sm:$0xff]
  %v908 = vld [vmem:[%s4 + $0x18] sm:$0xff]
  %v909 = vld [vmem:[%s5] sm:$0x1]
  %v911 = vlaneseq
  %v912 = vshrl.u32 %v911, 7
  %v913 = vsub.s32 0, %v912
  %v914 = vrot.slane %v909, %v913
  %917 = vrot.lane.b32.xlu0 %v904, 32
  %v918 = vpop.permute.xlu0 %917
  %v919 = vsel %vm43, %v918, 0
  %921 = vmatprep.subr.mxu0 0.0
  %922 = vmatpush1.msra.mxu0 %v905
  %923 = vmatprep.subr.mxu0 0.0
  %924 = vmatpush1.msra.mxu0 %v906
  %925 = vmatprep.subr.mxu0 0.0
  %926 = vmatpush1.msra.mxu0 %v907
  %927 = vmatprep.subr.mxu0 0.0
  %928 = vmatpush1.msra.mxu0 %v908
  %929 = vmatprep.subr.mxu0 0.0
  %930 = vmatpush1.msra.mxu0 0.0
  %931 = vmatprep.subr.mxu0 0.0
  %932 = vmatpush1.msra.mxu0 0.0
  %933 = vmatprep.subr.mxu0 0.0
  %934 = vmatpush1.msra.mxu0 0.0
  %935 = vmatprep.subr.mxu0 0.0
  %936 = vmatpush1.msra.mxu0 0.0
  %937 = vmatprep.subr.mxu0 0.0
  %938 = vmatpush1.msra.mxu0 0.0
  %939 = vmatprep.subr.mxu0 0.0
  %940 = vmatpush1.msra.mxu0 0.0
  %941 = vmatprep.subr.mxu0 0.0
  %942 = vmatpush1.msra.mxu0 0.0
  %943 = vmatprep.subr.mxu0 0.0
  %944 = vmatpush1.msra.mxu0 0.0
  %945 = vmatprep.subr.mxu0 0.0
  %946 = vmatpush1.msra.mxu0 0.0
  %947 = vmatprep.subr.mxu0 0.0
  %948 = vmatpush1.msra.mxu0 0.0
  %949 = vmatprep.subr.mxu0 0.0
  %950 = vmatpush1.msra.mxu0 0.0
  %951 = vmatprep.subr.mxu0 0.0
  %952 = vmatpush1.msra.mxu0 0.0
  %953 = vmatprep.subr.mxu0 0.0
  %954 = vmatpush1.msra.mxu0 0.0
  %955 = vmatprep.subr.mxu0 0.0
  %956 = vmatpush1.msra.mxu0 0.0
  %957 = vmatprep.subr.mxu0 0.0
  %958 = vmatpush1.msra.mxu0 0.0
  %959 = vmatprep.subr.mxu0 0.0
  %960 = vmatpush1.msra.mxu0 0.0
  %961 = vmatprep.subr.mxu0 0.0
  %962 = vmatpush1.msra.mxu0 0.0
  %963 = vmatprep.subr.mxu0 0.0
  %964 = vmatpush1.msra.mxu0 0.0
  %965 = vmatprep.subr.mxu0 0.0
  %966 = vmatpush1.msra.mxu0 0.0
  %967 = vmatprep.subr.mxu0 0.0
  %968 = vmatpush1.msra.mxu0 0.0
  %969 = vmatprep.subr.mxu0 0.0
  %970 = vmatpush1.msra.mxu0 0.0
  %971 = vmatprep.subr.mxu0 0.0
  %972 = vmatpush1.msra.mxu0 0.0
  %973 = vmatprep.subr.mxu0 0.0
  %974 = vmatpush1.msra.mxu0 0.0
  %975 = vmatprep.subr.mxu0 0.0
  %976 = vmatpush1.msra.mxu0 0.0
  %977 = vmatprep.subr.mxu0 0.0
  %978 = vmatpush1.msra.mxu0 0.0
  %979 = vmatprep.subr.mxu0 0.0
  %980 = vmatpush1.msra.mxu0 0.0
  %981 = vmatprep.subr.mxu0 0.0
  %982 = vmatpush1.msra.mxu0 0.0
  %983 = vmatprep.subr.mxu0 0.0
  %984 = vmatpush1.msra.mxu0 0.0
  %985 = vmatprep.mubr.f32.mxu0 0.0
  %986 = vmatmul.mubr.f32.gmra.mrb[0].mxu0 %v919
  %v987 = vpop.f32.mrb[0].mxu0
  %v988 = vadd.f32 %v914, %v987
  %v989 = vpop.f32.mrb[0].mxu0
  %990 = vdwg.mxu0
  %vm991 = vcmask 23552
  %v992 = vsel %vm991, %v988, -inf
  %993 = vmax.xlane.f32.xlu0 %v992
  %v994 = vpop.xlane.xlu0 %993
  %v995 = vsub.f32 %v988, %v994
  %v996 = vmul.f32 %v995, 1.442695
  %v997 = vpow.pop %v996
  %v998 = vsel %vm991, %v997, 0.0
  %999 = vadd.xlane.f32.xlu0 %v998
  %v1000 = vpop.xlane.xlu0 %999
  %v1001 = vlog2.pop %v1000
  %v1002 = vmul.f32 %v1001, 0.6931472
  %v1003 = vsub.f32 %v995, %v1002
  %1004 = vst.msk [vmem:[%s6] sm:$0xff] %vm991, %v1003
  // Predicated region
  $region26: #{tagger_forward.1} parent=0 // pred_check
    _
  $region27: #{tagger_forward.1} parent=0 // pred_check_branch
    %1006 = sbr.rel (0) target = $region29
  $region28: #{tagger_forward.1} parent=0 // pred_region
    _
  $region29: #{tagger_forward.1} parent=0 // pred_fallthru
    _
  // Predicated region
  $region30: #{tagger_forward.1} parent=0 // pred_check
    _
  $region31: #{tagger_forward.1} parent=0 // pred_check_branch
    %1008 = sbr.rel (0) target = $region33
  $region32: #{tagger_forward.1} parent=0 // pred_region
    _
  $region33: #{tagger_forward.1} parent=0 // pred_fallthru
    _

</llo_original>
